<compile_context>
chip_gen: v7x
topology: tpu7x:2x2x1
jax: 0.10.0
libtpu: 0.0.40
codegen_flags: <defaults>
</compile_context>

<pallas_src>
import functools

import jax
import jax.numpy as jnp
import numpy as np
from jax.experimental import pallas as pl
from jax.experimental.pallas import tpu as pltpu


def _round_up(n, m):
    return ((n + m - 1) // m) * m


def fcc_mlp_kernel(*refs, num_linear, use_bias):
    """refs = [x, w0, (b0), w1, (b1), ..., o_ref, acc_ref].

    x:   (tile_b, tk) bf16 slice of the flattened input (K-tiled).
    w0:  (tk, H0_pad) bf16 slice of the first Linear's weight.
    wi:  (in_pad, out_pad) bf16 resident weights for the small hidden layers.
    bi:  (1, out_pad) f32 biases (only when use_bias).
    o_ref:   (tile_b, C_pad) f32 logits tile (written on the last K step).
    acc_ref: (tile_b, H0_pad) f32 VMEM accumulator for layer 0.
    """
    x_ref, w0_ref = refs[0], refs[1]
    idx = 2
    b0_ref = None
    if use_bias:
        b0_ref = refs[idx]
        idx += 1
    rest = refs[idx:-2]          # (w_i, [b_i]) for layers 1 .. num_linear-1
    o_ref, acc_ref = refs[-2], refs[-1]

    k = pl.program_id(1)

    @pl.when(k == 0)
    def _init():
        acc_ref[...] = jnp.zeros_like(acc_ref)

    # Layer-0 partial product on the MXU, f32 accumulation in VMEM scratch.
    acc_ref[...] += jnp.dot(x_ref[...], w0_ref[...],
                            preferred_element_type=jnp.float32)

    @pl.when(k == pl.num_programs(1) - 1)
    def _finalize():
        acc = acc_ref[...]
        if use_bias:
            acc = acc + b0_ref[...]
        if num_linear == 1:
            o_ref[...] = acc.astype(o_ref.dtype)
            return
        h = jnp.maximum(acc, 0.0).astype(jnp.bfloat16)   # ReLU, back to bf16
        ri = 0
        for i in range(1, num_linear):                    # static unroll
            w_ref = rest[ri]
            ri += 1
            b_ref = None
            if use_bias:
                b_ref = rest[ri]
                ri += 1
            a = jnp.dot(h, w_ref[...], preferred_element_type=jnp.float32)
            if b_ref is not None:
                a = a + b_ref[...]
            if i < num_linear - 1:
                h = jnp.maximum(a, 0.0).astype(jnp.bfloat16)
            else:
                o_ref[...] = a.astype(o_ref.dtype)        # logits (no activation)


def prepare_fcc_params(weights, biases=None, *, max_tk=512):
    """One-time weight layout (do NOT redo per forward call).

    weights: torch-layout Linear weights, each (out_features, in_features):
             num_layers hidden layers followed by the logits layer.
    biases:  matching list of (out_features,) arrays, or None.
    Returns (weights_padded, biases_padded_or_None) where each padded weight is
    (in_pad, out_pad) bf16 and each padded bias is (1, out_pad) f32.  The first
    layer's input dim is padded to a multiple of the K tile (max_tk).
    """
    D = int(weights[0].shape[1])
    dims = [D] + [int(w.shape[0]) for w in weights]
    dims_pad = [_round_up(d, 128) for d in dims]
    tk = min(dims_pad[0], max_tk)
    dims_pad[0] = _round_up(dims_pad[0], tk)

    wp, bp = [], []
    for li, w in enumerate(weights):
        in_p, out_p = dims_pad[li], dims_pad[li + 1]
        w_t = jnp.transpose(jnp.asarray(w)).astype(jnp.bfloat16)   # (in, out)
        wp.append(jnp.pad(w_t, ((0, in_p - w_t.shape[0]),
                                (0, out_p - w_t.shape[1]))))
        if biases is not None:
            b = jnp.asarray(biases[li]).astype(jnp.float32)
            bp.append(jnp.pad(b, (0, out_p - b.shape[0])).reshape(1, out_p))
    return tuple(wp), (tuple(bp) if biases is not None else None)


@functools.partial(jax.jit, static_argnames=("num_classes",))
def fcc_network_forward(x, weights_p, biases_p=None, *, num_classes=None):
    """Forward pass of FCCNetwork with pre-laid-out params.

    x: (B, ...) input batch (flattened per-sample like torch .view(B, -1)).
    weights_p / biases_p: output of prepare_fcc_params.
    Returns (B, num_classes) float32 logits.
    """
    B = x.shape[0]
    x_flat = x.reshape(B, -1)
    D = x_flat.shape[1]
    use_bias = biases_p is not None
    num_linear = len(weights_p)

    D_pad = int(weights_p[0].shape[0])
    H0_pad = int(weights_p[0].shape[1])
    C_pad = int(weights_p[-1].shape[1])
    dims_pad = [D_pad] + [int(w.shape[1]) for w in weights_p]
    assert D <= D_pad, "prepared params do not match the input feature dim"

    # ---- K tiling for layer 0 (multiple of 256 -> full v6e/v7x MXU pushes) ----
    tk = min(D_pad, 512)
    nk = D_pad // tk

    # ---- VMEM budget -> batch tile size & scoped-VMEM limit ----
    weight_bytes = 2 * tk * H0_pad * 2                       # W0 tile, double-buffered bf16
    weight_bytes += sum(int(np.prod(w.shape)) * 2 for w in weights_p[1:])  # resident (1 buf)
    if use_bias:
        weight_bytes += sum(int(np.prod(b.shape)) * 4 for b in biases_p)
    per_row = (2 * tk * 2            # x tile, double-buffered bf16
               + 2 * C_pad * 4       # out tile, double-buffered f32
               + H0_pad * 4          # layer-0 f32 accumulator scratch
               + max(dims_pad[1:]) * 6)   # hidden activation temporaries
    budget = (44 << 20) - weight_bytes     # keep under ~48 MiB even on v7x (64 MiB VMEM)
    tile_b = max(16, min(1024, (budget // max(per_row, 1)) // 16 * 16))
    tile_b = min(tile_b, _round_up(B, 16))
    if B >= 32:
        # >= 2 grid steps on the "parallel" batch axis so v7x megacore shards it.
        tile_b = min(tile_b, _round_up((B + 1) // 2, 16))
    B_pad = _round_up(B, tile_b)

    vmem_need = weight_bytes + tile_b * per_row + (2 << 20)
    vmem_limit = int(min(max(vmem_need, 32 << 20), 64 << 20))

    # ---- single-pass input pad (skipped when already aligned) ----
    x_p = x_flat.astype(jnp.bfloat16)
    if (B_pad, D_pad) != (B, D):
        x_p = jnp.pad(x_p, ((0, B_pad - B), (0, D_pad - D)))

    # ---- specs ----
    resident = dict(pipeline_mode=pl.Buffered(1))   # constant blocks: 1 VMEM copy
    ins = [x_p, weights_p[0]]
    in_specs = [
        pl.BlockSpec((tile_b, tk), lambda i, k: (i, k)),
        pl.BlockSpec((tk, H0_pad), lambda i, k: (k, 0)),
    ]
    if use_bias:
        ins.append(biases_p[0])
        in_specs.append(pl.BlockSpec(biases_p[0].shape, lambda i, k: (0, 0), **resident))
    for li in range(1, num_linear):
        ins.append(weights_p[li])
        in_specs.append(pl.BlockSpec(weights_p[li].shape, lambda i, k: (0, 0), **resident))
        if use_bias:
            ins.append(biases_p[li])
            in_specs.append(pl.BlockSpec(biases_p[li].shape, lambda i, k: (0, 0), **resident))

    out = pl.pallas_call(
        functools.partial(fcc_mlp_kernel, num_linear=num_linear, use_bias=use_bias),
        out_shape=jax.ShapeDtypeStruct((B_pad, C_pad), jnp.float32),
        grid=(B_pad // tile_b, nk),
        in_specs=in_specs,
        out_specs=pl.BlockSpec((tile_b, C_pad), lambda i, k: (i, 0)),
        scratch_shapes=[pltpu.VMEM((tile_b, H0_pad), jnp.float32)],
        compiler_params=pltpu.CompilerParams(
            dimension_semantics=("parallel", "arbitrary"),
            vmem_limit_bytes=vmem_limit),
    )(*ins)

    C = C_pad if num_classes is None else num_classes
    return out[:B, :C]


def reference(x, weights, biases=None):
    """Pure-JAX f32 reference matching FCCNetwork.forward."""
    out = x.reshape(x.shape[0], -1).astype(jnp.float32)
    n = len(weights)
    for i, w in enumerate(weights):
        out = out @ w.T.astype(jnp.float32)
        if biases is not None:
            out = out + biases[i].astype(jnp.float32)
        if i < n - 1:
            out = jnp.maximum(out, 0.0)
    return out


if __name__ == "__main__":
    # FCCNetwork(input_shape=(2, 4, 16, 16), num_output_classes=10,
    #            num_filters=32, num_layers=3, use_bias=False)
    N, Cch, H, W = 2, 4, 16, 16
    num_filters, num_layers, num_classes = 32, 3, 10
    use_bias = False  # module default

    key = jax.random.PRNGKey(0)
    key, kx = jax.random.split(key)
    x = jax.random.normal(kx, (N, Cch, H, W), jnp.float32)

    # torch nn.Linear default init: U(-1/sqrt(fan_in), 1/sqrt(fan_in))
    fan_ins = [Cch * H * W] + [num_filters] * num_layers
    fan_outs = [num_filters] * num_layers + [num_classes]
    weights = []
    for fan_in, fan_out in zip(fan_ins, fan_outs):
        key, kw = jax.random.split(key)
        bound = 1.0 / np.sqrt(fan_in)
        weights.append(jax.random.uniform(kw, (fan_out, fan_in), jnp.float32,
                                          minval=-bound, maxval=bound))
    biases = None  # use_bias=False

    # One-time parameter layout (hoisted out of the forward path).
    weights_p, biases_p = prepare_fcc_params(weights, biases)

    out = fcc_network_forward(x, weights_p, biases_p, num_classes=num_classes)
    out = jax.block_until_ready(out)

    ref = reference(x, weights, biases)
    np.testing.assert_allclose(np.asarray(out), np.asarray(ref),
                               atol=2e-2, rtol=2e-2)
    assert out.shape == (N, num_classes)
    print("KERNEL_OK")
</pallas_src>

<mosaic_0001>
module attributes {stable_mosaic.version = 11 : i64} {
  func.func @fcc_mlp_kernel(%arg0: i32, %arg1: i32, %arg2: memref<16x512xbf16, #tpu.memory_space<vmem>>, %arg3: memref<512x128xbf16, #tpu.memory_space<vmem>>, %arg4: memref<128x128xbf16, #tpu.memory_space<vmem>>, %arg5: memref<128x128xbf16, #tpu.memory_space<vmem>>, %arg6: memref<128x128xbf16, #tpu.memory_space<vmem>>, %arg7: memref<16x128xf32, #tpu.memory_space<vmem>>, %arg8: memref<16x128xf32, #tpu.memory_space<vmem>>) attributes {dimension_semantics = [#tpu.dimension_semantics<parallel>, #tpu.dimension_semantics<arbitrary>], iteration_bounds = array<i64: 1, 2>, scalar_prefetch = 0 : i64, scratch_operands = 1 : i64, tpu.core_type = #tpu.core_type<tc>, window_params = [{transform_indices = @transform_0, window_bounds = array<i64: 16, 512>}, {transform_indices = @transform_1, window_bounds = array<i64: 512, 128>}, {pipeline_mode = #tpu.pipeline_mode<synchronous>, transform_indices = @transform_2, window_bounds = array<i64: 128, 128>}, {pipeline_mode = #tpu.pipeline_mode<synchronous>, transform_indices = @transform_3, window_bounds = array<i64: 128, 128>}, {pipeline_mode = #tpu.pipeline_mode<synchronous>, transform_indices = @transform_4, window_bounds = array<i64: 128, 128>}, {transform_indices = @transform_5, window_bounds = array<i64: 16, 128>}]} {
    %c0_i32 = arith.constant 0 : i32
    %0 = arith.cmpi eq, %arg1, %c0_i32 : i32
    %1 = arith.extui %0 : i1 to i32
    %c0_i32_0 = arith.constant 0 : i32
    %2 = arith.cmpi ne, %1, %c0_i32_0 : i32
    scf.if %2 {
      %cst_9 = arith.constant 0.000000e+00 : f32
      %12 = vector.broadcast %cst_9 : f32 to vector<16x128xf32>
      %c0_10 = arith.constant 0 : index
      %c0_11 = arith.constant 0 : index
      %13 = vector.load %arg8[%c0_10, %c0_11] : memref<16x128xf32, #tpu.memory_space<vmem>>, vector<16x128xf32>
      tpu.vector_store %arg8[%c0_10, %c0_11], %12 {strides = array<i32>} : memref<16x128xf32, #tpu.memory_space<vmem>>, vector<16x128xf32>,
    } else {
    }
    %c0 = arith.constant 0 : index
    %c0_1 = arith.constant 0 : index
    %3 = vector.load %arg8[%c0, %c0_1] : memref<16x128xf32, #tpu.memory_space<vmem>>, vector<16x128xf32>
    %c0_2 = arith.constant 0 : index
    %c0_3 = arith.constant 0 : index
    %4 = vector.load %arg2[%c0_2, %c0_3] : memref<16x512xbf16, #tpu.memory_space<vmem>>, vector<16x512xbf16>
    %c0_4 = arith.constant 0 : index
    %c0_5 = arith.constant 0 : index
    %5 = vector.load %arg3[%c0_4, %c0_5] : memref<512x128xbf16, #tpu.memory_space<vmem>>, vector<512x128xbf16>
    %cst = arith.constant dense<0.000000e+00> : vector<16x128xf32>
    %6 = tpu.matmul %4, %5, %cst {dimension_numbers = #tpu.dot_dimension_numbers<[1], [0], [0], [1], [0, 0, 1, 1], [], []>} : vector<16x512xbf16>, vector<512x128xbf16>, vector<16x128xf32> -> vector<16x128xf32>
    %7 = arith.addf %3, %6 : vector<16x128xf32>
    %c0_6 = arith.constant 0 : index
    %c0_7 = arith.constant 0 : index
    %8 = vector.load %arg8[%c0_6, %c0_7] : memref<16x128xf32, #tpu.memory_space<vmem>>, vector<16x128xf32>
    tpu.vector_store %arg8[%c0_6, %c0_7], %7 {strides = array<i32>} : memref<16x128xf32, #tpu.memory_space<vmem>>, vector<16x128xf32>,
    %c1_i32 = arith.constant 1 : i32
    %9 = arith.cmpi eq, %arg1, %c1_i32 : i32
    %10 = arith.extui %9 : i1 to i32
    %c0_i32_8 = arith.constant 0 : i32
    %11 = arith.cmpi ne, %10, %c0_i32_8 : i32
    scf.if %11 {
      %c0_9 = arith.constant 0 : index
      %c0_10 = arith.constant 0 : index
      %12 = vector.load %arg8[%c0_9, %c0_10] : memref<16x128xf32, #tpu.memory_space<vmem>>, vector<16x128xf32>
      %cst_11 = arith.constant 0.000000e+00 : f32
      %13 = vector.broadcast %cst_11 : f32 to vector<16x128xf32>
      %14 = arith.maximumf %12, %13 : vector<16x128xf32>
      %15 = arith.truncf %14 : vector<16x128xf32> to vector<16x128xbf16>
      %c0_12 = arith.constant 0 : index
      %c0_13 = arith.constant 0 : index
      %16 = vector.load %arg4[%c0_12, %c0_13] : memref<128x128xbf16, #tpu.memory_space<vmem>>, vector<128x128xbf16>
      %cst_14 = arith.constant dense<0.000000e+00> : vector<16x128xf32>
      %17 = tpu.matmul %15, %16, %cst_14 {dimension_numbers = #tpu.dot_dimension_numbers<[1], [0], [0], [1], [0, 0, 1, 1], [], []>} : vector<16x128xbf16>, vector<128x128xbf16>, vector<16x128xf32> -> vector<16x128xf32>
      %cst_15 = arith.constant 0.000000e+00 : f32
      %18 = vector.broadcast %cst_15 : f32 to vector<16x128xf32>
      %19 = arith.maximumf %17, %18 : vector<16x128xf32>
      %20 = arith.truncf %19 : vector<16x128xf32> to vector<16x128xbf16>
      %c0_16 = arith.constant 0 : index
      %c0_17 = arith.constant 0 : index
      %21 = vector.load %arg5[%c0_16, %c0_17] : memref<128x128xbf16, #tpu.memory_space<vmem>>, vector<128x128xbf16>
      %cst_18 = arith.constant dense<0.000000e+00> : vector<16x128xf32>
      %22 = tpu.matmul %20, %21, %cst_18 {dimension_numbers = #tpu.dot_dimension_numbers<[1], [0], [0], [1], [0, 0, 1, 1], [], []>} : vector<16x128xbf16>, vector<128x128xbf16>, vector<16x128xf32> -> vector<16x128xf32>
      %cst_19 = arith.constant 0.000000e+00 : f32
      %23 = vector.broadcast %cst_19 : f32 to vector<16x128xf32>
      %24 = arith.maximumf %22, %23 : vector<16x128xf32>
      %25 = arith.truncf %24 : vector<16x128xf32> to vector<16x128xbf16>
      %c0_20 = arith.constant 0 : index
      %c0_21 = arith.constant 0 : index
      %26 = vector.load %arg6[%c0_20, %c0_21] : memref<128x128xbf16, #tpu.memory_space<vmem>>, vector<128x128xbf16>
      %cst_22 = arith.constant dense<0.000000e+00> : vector<16x128xf32>
      %27 = tpu.matmul %25, %26, %cst_22 {dimension_numbers = #tpu.dot_dimension_numbers<[1], [0], [0], [1], [0, 0, 1, 1], [], []>} : vector<16x128xbf16>, vector<128x128xbf16>, vector<16x128xf32> -> vector<16x128xf32>
      %c0_23 = arith.constant 0 : index
      %c0_24 = arith.constant 0 : index
      %28 = vector.load %arg7[%c0_23, %c0_24] : memref<16x128xf32, #tpu.memory_space<vmem>>, vector<16x128xf32>
      tpu.vector_store %arg7[%c0_23, %c0_24], %27 {strides = array<i32>} : memref<16x128xf32, #tpu.memory_space<vmem>>, vector<16x128xf32>,
    } else {
    }
    return
  }
  func.func @transform_0(%arg0: i32, %arg1: i32) -> (i32, i32) {
    %c0_i32 = arith.constant 0 : i32
    return %arg0, %arg1 : i32, i32
  }
  func.func @transform_1(%arg0: i32, %arg1: i32) -> (i32, i32) {
    %c0_i32 = arith.constant 0 : i32
    %c0_i32_0 = arith.constant 0 : i32
    return %arg1, %c0_i32 : i32, i32
  }
  func.func @transform_2(%arg0: i32, %arg1: i32) -> (i32, i32) {
    %c0_i32 = arith.constant 0 : i32
    %c0_i32_0 = arith.constant 0 : i32
    %c0_i32_1 = arith.constant 0 : i32
    return %c0_i32, %c0_i32_0 : i32, i32
  }
  func.func @transform_3(%arg0: i32, %arg1: i32) -> (i32, i32) {
    %c0_i32 = arith.constant 0 : i32
    %c0_i32_0 = arith.constant 0 : i32
    %c0_i32_1 = arith.constant 0 : i32
    return %c0_i32, %c0_i32_0 : i32, i32
  }
  func.func @transform_4(%arg0: i32, %arg1: i32) -> (i32, i32) {
    %c0_i32 = arith.constant 0 : i32
    %c0_i32_0 = arith.constant 0 : i32
    %c0_i32_1 = arith.constant 0 : i32
    return %c0_i32, %c0_i32_0 : i32, i32
  }
  func.func @transform_5(%arg0: i32, %arg1: i32) -> (i32, i32) {
    %c0_i32 = arith.constant 0 : i32
    %c0_i32_0 = arith.constant 0 : i32
    return %arg0, %c0_i32 : i32, i32
  }
}

</mosaic_0001>

<llo_original>
// kernel: fcc_network_forward.1
$region0: #{fcc_network_forward.1}
  #allocation0 [shape = 'u32[]', space=smem, size = 0x4, offset = 0x4, fixed_abs, tag = 'smem constant byte address 0x4 - core index']
  #allocation1 [shape = 'u32[144,128]{1,0:T(1,128)}', space=vmem, size = 0x12000, scoped, tag = 'internal scratch']
  #allocation2 [shape = 'f32[16,128]{1,0:T(8,128)}', space=vmem, size = 0x2000, scoped, tag = 'scratch operand']
  %s0 = inlined_call_operand.vmem [shape: bf16[16,1024], index: 0, kind: input, shape index: {}]
  %s1 = inlined_call_operand.hbm [shape: bf16[1024,128], index: 1, kind: input, shape index: {}]
  %s2 = inlined_call_operand.vmem [shape: bf16[128,128], index: 2, kind: input, shape index: {}]
  %s3 = inlined_call_operand.vmem [shape: bf16[128,128], index: 3, kind: input, shape index: {}]
  %s4 = inlined_call_operand.vmem [shape: bf16[128,128], index: 4, kind: input, shape index: {}]
  %s5 = inlined_call_operand.vmem [shape: f32[16,128], index: 5, kind: output, shape index: {}]
  %s6 = sld [smem:[#allocation0]]
  $region88: #{fcc_network_forward.1} parent=0
    _
  %s8 = ssub.s32 1, %s6
  %s9 = scalar_select 0, %s8, %s6
  $region1: #{fcc_network_forward.1} parent=0
    #allocation3 [shape = 'u8[32768]{0}', space=vmem, size = 0x8000, scoped, tag = 'input window, operand 0']
    #allocation4 [shape = 'u8[262144]{0}', space=vmem, size = 0x40000, scoped, tag = 'input window, operand 1']
    #allocation5 [shape = 's32[2]{0}', space=sflag, size = 0x8, scoped, tag = 'scoped memory for fcc_network_forward.1']
    %10 = vsyncpa [#allocation5], 0
    %s11 = scalar_lea.sflag [#allocation5], 1
    %12 = vsyncpa %s11, 0
    loop: start=0, step=1, limit=4
    $region2: #{fcc_network_forward.1} parent=1 // loop_pre_header
      _
    $region3: #{fcc_network_forward.1} parent=1 // loop_header
      %s14 = sphi 0, %s18
      %p15 = scmp.ge.s32.totalorder %s14, 4
      %s21 = sphi 0, %s33
      %s22 = sphi 0, %s29
      %s23 = sphi 0, %s21
      %s24 = sphi 0, %s22
      %s25 = sphi 0, %s23
      %s26 = sphi 0, %s24
      %s38 = sphi 0, %s40
      %s41 = sphi 0, %s38
      %s42 = sphi 0, %s41
      %s58 = sphi 0, %s42
      %s64 = sphi 0, %s66
      %s67 = sphi 0, %s64
      %s68 = sphi 0, %s67
      %s84 = sphi 0, %s68
      %s88 = sphi 0, %s88
      %s90 = sphi 0, %s88
      %s91 = sphi 0, %s90
      %s105 = sphi 0, %s91
      %s109 = sphi 0, %s109
      %s111 = sphi 0, %s109
      %s112 = sphi 0, %s111
      %s126 = sphi 0, %s112
      %s130 = sphi 0, %s130
      %s132 = sphi 0, %s130
      %s133 = sphi 0, %s132
      %s147 = sphi 0, %s133
      %s153 = sphi 0, %s155
      %s156 = sphi 0, %s153
      %s157 = sphi 0, %s156
      %s173 = sphi 0, %s157
    $region4: #{fcc_network_forward.1} parent=1 // loop_header_branch
      %17 = sbr.rel (%p15) target = $region8
    $region5: #{fcc_network_forward.1} parent=1 // loop_body
      %s19 = ssub.s32 %s14, 1
      %s20 = ssub.s32 %s14, 2
      %s27 = sadd.s32 1, %s22
      %p28 = scmp.ge.s32.totalorder %s27, 2
      %s29 = scalar_select %p28, 0, %s27
      %s30 = sadd.s32 1, %s21
      %s31 = scalar_select %p28, %s30, %s21
      %p32 = scmp.ge.s32.totalorder %s31, 1
      %s33 = scalar_select %p32, 0, %s31
      %s34 = ssub.s32 %s21, %s33
      %s35 = ssub.s32 %s22, %s29
      %s36 = sor.u32 %s34, %s35
      %p37 = scmp.eq.s32.totalorder %s36, 0
      %s39 = sadd.s32 %s38, 1
      %s40 = scalar_select %p37, %s38, %s39
      %p43 = pneg %p37
      %p44 = scmp.eq.s32.totalorder %s14, 1
      %p45 = por %p43, %p44
      %p46 = scmp.ne.s32.totalorder %s38, %s41
      %p47 = scmp.eq.s32.totalorder %s14, 0
      %p48 = por %p46, %p47
      %p49 = scmp.ne.s32.totalorder %s38, %s41
      %p50 = scmp.eq.s32.totalorder %s19, 1
      %p51 = por %p49, %p50
      %p52 = scmp.ne.s32.totalorder %s41, %s42
      %p53 = scmp.eq.s32.totalorder %s19, 0
      %p54 = por %p52, %p53
      %p55 = scmp.ne.s32.totalorder %s41, %s42
      %p56 = scmp.eq.s32.totalorder %s20, 1
      %p57 = por %p55, %p56
      %p59 = scmp.ne.s32.totalorder %s42, %s58
      %p60 = scmp.eq.s32.totalorder %s20, 0
      %p61 = por %p59, %p60
      %s62 = ssub.s32 %s22, %s29
      %p63 = scmp.eq.s32.totalorder %s62, 0
      %s65 = sadd.s32 %s64, 1
      %s66 = scalar_select %p63, %s64, %s65
      %p69 = pneg %p63
      %p70 = scmp.eq.s32.totalorder %s14, 1
      %p71 = por %p69, %p70
      %p72 = scmp.ne.s32.totalorder %s64, %s67
      %p73 = scmp.eq.s32.totalorder %s14, 0
      %p74 = por %p72, %p73
      %p75 = scmp.ne.s32.totalorder %s64, %s67
      %p76 = scmp.eq.s32.totalorder %s19, 1
      %p77 = por %p75, %p76
      %p78 = scmp.ne.s32.totalorder %s67, %s68
      %p79 = scmp.eq.s32.totalorder %s19, 0
      %p80 = por %p78, %p79
      %p81 = scmp.ne.s32.totalorder %s67, %s68
      %p82 = scmp.eq.s32.totalorder %s20, 1
      %p83 = por %p81, %p82
      %p85 = scmp.ne.s32.totalorder %s68, %s84
      %p86 = scmp.eq.s32.totalorder %s20, 0
      %p87 = por %p85, %p86
      %s89 = sadd.s32 %s88, 1
      %p92 = scmp.eq.s32.totalorder %s14, 1
      %p93 = scmp.ne.s32.totalorder %s88, %s90
      %p94 = scmp.eq.s32.totalorder %s14, 0
      %p95 = por %p93, %p94
      %p96 = scmp.ne.s32.totalorder %s88, %s90
      %p97 = scmp.eq.s32.totalorder %s19, 1
      %p98 = por %p96, %p97
      %p99 = scmp.ne.s32.totalorder %s90, %s91
      %p100 = scmp.eq.s32.totalorder %s19, 0
      %p101 = por %p99, %p100
      %p102 = scmp.ne.s32.totalorder %s90, %s91
      %p103 = scmp.eq.s32.totalorder %s20, 1
      %p104 = por %p102, %p103
      %p106 = scmp.ne.s32.totalorder %s91, %s105
      %p107 = scmp.eq.s32.totalorder %s20, 0
      %p108 = por %p106, %p107
      %s110 = sadd.s32 %s109, 1
      %p113 = scmp.eq.s32.totalorder %s14, 1
      %p114 = scmp.ne.s32.totalorder %s109, %s111
      %p115 = scmp.eq.s32.totalorder %s14, 0
      %p116 = por %p114, %p115
      %p117 = scmp.ne.s32.totalorder %s109, %s111
      %p118 = scmp.eq.s32.totalorder %s19, 1
      %p119 = por %p117, %p118
      %p120 = scmp.ne.s32.totalorder %s111, %s112
      %p121 = scmp.eq.s32.totalorder %s19, 0
      %p122 = por %p120, %p121
      %p123 = scmp.ne.s32.totalorder %s111, %s112
      %p124 = scmp.eq.s32.totalorder %s20, 1
      %p125 = por %p123, %p124
      %p127 = scmp.ne.s32.totalorder %s112, %s126
      %p128 = scmp.eq.s32.totalorder %s20, 0
      %p129 = por %p127, %p128
      %s131 = sadd.s32 %s130, 1
      %p134 = scmp.eq.s32.totalorder %s14, 1
      %p135 = scmp.ne.s32.totalorder %s130, %s132
      %p136 = scmp.eq.s32.totalorder %s14, 0
      %p137 = por %p135, %p136
      %p138 = scmp.ne.s32.totalorder %s130, %s132
      %p139 = scmp.eq.s32.totalorder %s19, 1
      %p140 = por %p138, %p139
      %p141 = scmp.ne.s32.totalorder %s132, %s133
      %p142 = scmp.eq.s32.totalorder %s19, 0
      %p143 = por %p141, %p142
      %p144 = scmp.ne.s32.totalorder %s132, %s133
      %p145 = scmp.eq.s32.totalorder %s20, 1
      %p146 = por %p144, %p145
      %p148 = scmp.ne.s32.totalorder %s133, %s147
      %p149 = scmp.eq.s32.totalorder %s20, 0
      %p150 = por %p148, %p149
      %s151 = ssub.s32 %s21, %s33
      %p152 = scmp.eq.s32.totalorder %s151, 0
      %s154 = sadd.s32 %s153, 1
      %s155 = scalar_select %p152, %s153, %s154
      %p158 = pneg %p152
      %p159 = scmp.eq.s32.totalorder %s14, 1
      %p160 = por %p158, %p159
      %p161 = scmp.ne.s32.totalorder %s153, %s156
      %p162 = scmp.eq.s32.totalorder %s14, 0
      %p163 = por %p161, %p162
      %p164 = scmp.ne.s32.totalorder %s153, %s156
      %p165 = scmp.eq.s32.totalorder %s19, 1
      %p166 = por %p164, %p165
      %p167 = scmp.ne.s32.totalorder %s156, %s157
      %p168 = scmp.eq.s32.totalorder %s19, 0
      %p169 = por %p167, %p168
      %p170 = scmp.ne.s32.totalorder %s156, %s157
      %p171 = scmp.eq.s32.totalorder %s20, 1
      %p172 = por %p170, %p171
      %p174 = scmp.ne.s32.totalorder %s157, %s173
      %p175 = scmp.eq.s32.totalorder %s20, 0
      %p176 = por %p174, %p175
      %p177 = scmp.le.s32.totalorder 1, %s14
      %p178 = scmp.lt.s32.totalorder %s14, 3
      %p179 = pnand %p177, %p178
      %p180 = pneg %p179
      // Predicated region
      $region9: #{fcc_network_forward.1} parent=5 // pred_check
        _
      $region10: #{fcc_network_forward.1} parent=5 // pred_check_branch
        %182 = sbr.rel (%p179) target = $region12
      $region11: #{fcc_network_forward.1} parent=5 // pred_region
        %s183 = ssub.s32 %s14, 1
        // Predicated region
        $region13: #{fcc_network_forward.1} parent=11 // pred_check
          %p184 = pneg %p101
        $region14: #{fcc_network_forward.1} parent=11 // pred_check_branch
          %186 = sbr.rel (%p184) target = $region16
        $region15: #{fcc_network_forward.1} parent=11 // pred_region
          _
        $region16: #{fcc_network_forward.1} parent=11 // pred_fallthru
          _
        // Predicated region
        $region17: #{fcc_network_forward.1} parent=11 // pred_check
          %p187 = pneg %p122
        $region18: #{fcc_network_forward.1} parent=11 // pred_check_branch
          %189 = sbr.rel (%p187) target = $region20
        $region19: #{fcc_network_forward.1} parent=11 // pred_region
          _
        $region20: #{fcc_network_forward.1} parent=11 // pred_fallthru
          _
        // Predicated region
        $region21: #{fcc_network_forward.1} parent=11 // pred_check
          %p190 = pneg %p143
        $region22: #{fcc_network_forward.1} parent=11 // pred_check_branch
          %192 = sbr.rel (%p190) target = $region24
        $region23: #{fcc_network_forward.1} parent=11 // pred_region
          _
        $region24: #{fcc_network_forward.1} parent=11 // pred_fallthru
          _
      $region12: #{fcc_network_forward.1} parent=5 // pred_fallthru
        _
      %p193 = scmp.lt.s32.totalorder %s14, 2
      // Predicated region
      $region25: #{fcc_network_forward.1} parent=5 // pred_check
        %p194 = pneg %p193
      $region26: #{fcc_network_forward.1} parent=5 // pred_check_branch
        %196 = sbr.rel (%p194) target = $region28
      $region27: #{fcc_network_forward.1} parent=5 // pred_region
        // Predicated region
        $region29: #{fcc_network_forward.1} parent=27 // pred_check
          %p197 = pneg %p48
        $region30: #{fcc_network_forward.1} parent=27 // pred_check_branch
          %199 = sbr.rel (%p197) target = $region32
        $region31: #{fcc_network_forward.1} parent=27 // pred_region
          %s200 = sand.u32 %s38, 1
          %s201 = sand.u32 %s38, 1
          %s202 = smul.addr %s201, 32
          %s203 = scalar_lea.vmem [#allocation3], %s202
          %s204 = smul.u32 2, %s21
          %s205 = smul.u32 4, %s22
          %s206 = smul.addr %s204, 8
          %s207 = sadd.s32 %s205, %s206
          %s208 = smul.addr %s207, 4
          %s209 = scalar_lea.vmem %s0, %s208
          // Predicated region
          $region33: #{fcc_network_forward.1} parent=31 // pred_check
            _
          $region34: #{fcc_network_forward.1} parent=31 // pred_check_branch
            %211 = sbr.rel (0) target = $region36
          $region35: #{fcc_network_forward.1} parent=31 // pred_region
            // Predicated region
            $region37: #{fcc_network_forward.1} parent=35 // pred_check
              _
            $region38: #{fcc_network_forward.1} parent=35 // pred_check_branch
              %213 = sbr.rel (0) target = $region40
            $region39: #{fcc_network_forward.1} parent=35 // pred_region
              loop: start=0, step=1, limit=1
              $region41: #{fcc_network_forward.1} parent=39 // loop_pre_header
                _
              $region42: #{fcc_network_forward.1} parent=39 // loop_header
                %s215 = sphi 0, %s219
                %p216 = scmp.ge.s32.totalorder %s215, 1
                %s220 = sphi %s209, %s209
                %s221 = sphi %s203, %s203
              $region43: #{fcc_network_forward.1} parent=39 // loop_header_branch
                %218 = sbr.rel (%p216) target = $region47
              $region44: #{fcc_network_forward.1} parent=39 // loop_body
                %v222 = vld [vmem:[%s220] sm:$0xff]
                %223 = vst [vmem:[%s221] sm:$0xff] %v222
                %v224 = vld [vmem:[%s220 + $0x8] sm:$0xff]
                %225 = vst [vmem:[%s221 + $0x8] sm:$0xff] %v224
                %v226 = vld [vmem:[%s220 + $0x20] sm:$0xff]
                %227 = vst [vmem:[%s221 + $0x10] sm:$0xff] %v226
                %v228 = vld [vmem:[%s220 + $0x28] sm:$0xff]
                %229 = vst [vmem:[%s221 + $0x18] sm:$0xff] %v228
              $region45: #{fcc_network_forward.1} parent=39 // loop_footer
                %s219 = sadd.s32 1, %s215
              $region46: #{fcc_network_forward.1} parent=39 // loop_footer_branch
                %214 = sbr.rel target = $region42
              $region47: #{fcc_network_forward.1} parent=39 // loop_exit
                _
            $region40: #{fcc_network_forward.1} parent=35 // pred_fallthru
              _
            // Predicated region
            $region48: #{fcc_network_forward.1} parent=35 // pred_check
              _
            $region49: #{fcc_network_forward.1} parent=35 // pred_check_branch
              %231 = sbr.rel target = $region51
            $region50: #{fcc_network_forward.1} parent=35 // pred_region
              _
            $region51: #{fcc_network_forward.1} parent=35 // pred_fallthru
              _
          $region36: #{fcc_network_forward.1} parent=31 // pred_fallthru
            _
          %232 = vnop
        $region32: #{fcc_network_forward.1} parent=27 // pred_fallthru
          _
        // Predicated region
        $region52: #{fcc_network_forward.1} parent=27 // pred_check
          %p233 = pneg %p74
        $region53: #{fcc_network_forward.1} parent=27 // pred_check_branch
          %235 = sbr.rel (%p233) target = $region55
        $region54: #{fcc_network_forward.1} parent=27 // pred_region
          %s236 = sand.u32 %s64, 1
          %s237 = scalar_lea.sflag [#allocation5], %s236
          %s238 = sand.u32 %s64, 1
          %s239 = smul.addr %s238, 256
          %s240 = scalar_lea.vmem [#allocation4], %s239
          %s241 = smul.u32 64, %s22
          %s243 = ssub.s32 4096, 4096
          %244 = vsyncadd %s237, %s243
          %s245 = smul.addr %s241, 64
          %s246 = scalar_lea.hbm %s1, %s245
          %s247 = sshll.u32 %s240, 4
          %s248 = int_to_ptr.vmem [resolvable:$true] %s247
          %253 = dma.hbm_to_vmem [thread:$0]  %s246, 4096, %s248, %s237, 64, 64, 4
        $region55: #{fcc_network_forward.1} parent=27 // pred_fallthru
          _
      $region28: #{fcc_network_forward.1} parent=5 // pred_fallthru
        _
      %p254 = scmp.le.s32.totalorder 1, %s14
      %p255 = scmp.lt.s32.totalorder %s14, 3
      %p256 = pnand %p254, %p255
      %p257 = pneg %p256
      // Predicated region
      $region56: #{fcc_network_forward.1} parent=5 // pred_check
        _
      $region57: #{fcc_network_forward.1} parent=5 // pred_check_branch
        %259 = sbr.rel (%p256) target = $region59
      $region58: #{fcc_network_forward.1} parent=5 // pred_region
        %s260 = ssub.s32 %s14, 1
        %s261 = sand.u32 %s41, 1
        %s262 = sand.u32 %s41, 1
        %s263 = smul.addr %s262, 32
        %s264 = scalar_lea.vmem [#allocation3], %s263
        // Predicated region
        $region60: #{fcc_network_forward.1} parent=58 // pred_check
          %p265 = pneg %p54
        $region61: #{fcc_network_forward.1} parent=58 // pred_check_branch
          %267 = sbr.rel (%p265) target = $region63
        $region62: #{fcc_network_forward.1} parent=58 // pred_region
          _
        $region63: #{fcc_network_forward.1} parent=58 // pred_fallthru
          _
        %s268 = sand.u32 %s67, 1
        %s269 = scalar_lea.sflag [#allocation5], %s268
        %s270 = sand.u32 %s67, 1
        %s271 = smul.addr %s270, 256
        %s272 = scalar_lea.vmem [#allocation4], %s271
        // Predicated region
        $region64: #{fcc_network_forward.1} parent=58 // pred_check
          %p273 = pneg %p80
        $region65: #{fcc_network_forward.1} parent=58 // pred_check_branch
          %275 = sbr.rel (%p273) target = $region67
        $region66: #{fcc_network_forward.1} parent=58 // pred_region
          %276 = dma.done %s269, 4096
        $region67: #{fcc_network_forward.1} parent=58 // pred_fallthru
          _
        %s277 = sand.u32 %s41, 1
        %s278 = sand.u32 %s41, 1
        %s279 = smul.addr %s278, 32
        %s280 = scalar_lea.vmem [#allocation3], %s279
        %p281 = pneg %p54
        %p282 = pneg %p51
        %s283 = sand.u32 %s67, 1
        %s284 = scalar_lea.sflag [#allocation5], %s283
        %s285 = sand.u32 %s67, 1
        %s286 = smul.addr %s285, 256
        %s287 = scalar_lea.vmem [#allocation4], %s286
        %p288 = pneg %p80
        %p289 = pneg %p77
        %p290 = pneg %p101
        %p291 = pneg %p98
        %p292 = pneg %p122
        %p293 = pneg %p119
        %p294 = pneg %p143
        %p295 = pneg %p140
        %p296 = pneg %p169
        %p297 = pneg %p166
        %s298 = smul.u32 2, %s23
        %p299 = scmp.lt.s32.totalorder %s298, 1
        %s300 = scalar_select %p299, %s298, 1
        %s301 = smul.addr %s300, 8
        %s302 = scalar_lea.vmem %s5, %s301
        %s303 = smul.u32 2, %s23
        %s304 = smul.u32 4, %s24
        %s305 = smul.u32 64, %s24
        %s306 = smul.u32 2, %s23
        %p307 = scmp.lt.s32.totalorder %s306, 1
        %s308 = scalar_select %p307, %s306, 1
        %s309 = smul.addr %s308, 8
        %s310 = scalar_lea.vmem %s5, %s309
        %s311 = smul.u32 2, %s23
        %p313 = scmp.eq.s32.totalorder %s24, 0
        // Predicated region
        $region68: #{fcc_network_forward.1} parent=58 // pred_check
          %p314 = pneg %p313
        $region69: #{fcc_network_forward.1} parent=58 // pred_check_branch
          %316 = sbr.rel (%p314) target = $region71
        $region70: #{fcc_network_forward.1} parent=58 // pred_region
          %317 = vst [vmem:[#allocation2] sm:$0xff] 0.0
          %318 = vst [vmem:[#allocation2 + $0x8] sm:$0xff] 0.0
        $region71: #{fcc_network_forward.1} parent=58 // pred_fallthru
          _
        %v319 = vld [vmem:[#allocation2] sm:$0xff]
        %v320 = vld [vmem:[#allocation2 + $0x8] sm:$0xff]
        %v321 = vld [vmem:[%s264] sm:$0xff]
        %v322 = vld [vmem:[%s264 + $0x8] sm:$0xff]
        %v323 = vld [vmem:[%s264 + $0x10] sm:$0xff]
        %v324 = vld [vmem:[%s264 + $0x18] sm:$0xff]
        %v325 = vld [vmem:[%s272] sm:$0xf]
        %v326 = vld [vmem:[%s272 + $0x4] sm:$0xf]
        %v327 = vld [vmem:[%s272 + $0x8] sm:$0xf]
        %v328 = vld [vmem:[%s272 + $0xc] sm:$0xf]
        %v329 = vld [vmem:[%s272 + $0x10] sm:$0xf]
        %v330 = vld [vmem:[%s272 + $0x14] sm:$0xf]
        %v331 = vld [vmem:[%s272 + $0x18] sm:$0xf]
        %v332 = vld [vmem:[%s272 + $0x1c] sm:$0xf]
        %v333 = vld [vmem:[%s272 + $0x20] sm:$0xf]
        %v334 = vld [vmem:[%s272 + $0x24] sm:$0xf]
        %v335 = vld [vmem:[%s272 + $0x28] sm:$0xf]
        %v336 = vld [vmem:[%s272 + $0x2c] sm:$0xf]
        %v337 = vld [vmem:[%s272 + $0x30] sm:$0xf]
        %v338 = vld [vmem:[%s272 + $0x34] sm:$0xf]
        %v339 = vld [vmem:[%s272 + $0x38] sm:$0xf]
        %v340 = vld [vmem:[%s272 + $0x3c] sm:$0xf]
        %v341 = vld [vmem:[%s272 + $0x40] sm:$0xf]
        %v342 = vld [vmem:[%s272 + $0x44] sm:$0xf]
        %v343 = vld [vmem:[%s272 + $0x48] sm:$0xf]
        %v344 = vld [vmem:[%s272 + $0x4c] sm:$0xf]
        %v345 = vld [vmem:[%s272 + $0x50] sm:$0xf]
        %v346 = vld [vmem:[%s272 + $0x54] sm:$0xf]
        %v347 = vld [vmem:[%s272 + $0x58] sm:$0xf]
        %v348 = vld [vmem:[%s272 + $0x5c] sm:$0xf]
        %v349 = vld [vmem:[%s272 + $0x60] sm:$0xf]
        %v350 = vld [vmem:[%s272 + $0x64] sm:$0xf]
        %v351 = vld [vmem:[%s272 + $0x68] sm:$0xf]
        %v352 = vld [vmem:[%s272 + $0x6c] sm:$0xf]
        %v353 = vld [vmem:[%s272 + $0x70] sm:$0xf]
        %v354 = vld [vmem:[%s272 + $0x74] sm:$0xf]
        %v355 = vld [vmem:[%s272 + $0x78] sm:$0xf]
        %v356 = vld [vmem:[%s272 + $0x7c] sm:$0xf]
        %v357 = vld [vmem:[%s272 + $0x80] sm:$0xf]
        %v358 = vld [vmem:[%s272 + $0x84] sm:$0xf]
        %v359 = vld [vmem:[%s272 + $0x88] sm:$0xf]
        %v360 = vld [vmem:[%s272 + $0x8c] sm:$0xf]
        %v361 = vld [vmem:[%s272 + $0x90] sm:$0xf]
        %v362 = vld [vmem:[%s272 + $0x94] sm:$0xf]
        %v363 = vld [vmem:[%s272 + $0x98] sm:$0xf]
        %v364 = vld [vmem:[%s272 + $0x9c] sm:$0xf]
        %v365 = vld [vmem:[%s272 + $0xa0] sm:$0xf]
        %v366 = vld [vmem:[%s272 + $0xa4] sm:$0xf]
        %v367 = vld [vmem:[%s272 + $0xa8] sm:$0xf]
        %v368 = vld [vmem:[%s272 + $0xac] sm:$0xf]
        %v369 = vld [vmem:[%s272 + $0xb0] sm:$0xf]
        %v370 = vld [vmem:[%s272 + $0xb4] sm:$0xf]
        %v371 = vld [vmem:[%s272 + $0xb8] sm:$0xf]
        %v372 = vld [vmem:[%s272 + $0xbc] sm:$0xf]
        %v373 = vld [vmem:[%s272 + $0xc0] sm:$0xf]
        %v374 = vld [vmem:[%s272 + $0xc4] sm:$0xf]
        %v375 = vld [vmem:[%s272 + $0xc8] sm:$0xf]
        %v376 = vld [vmem:[%s272 + $0xcc] sm:$0xf]
        %v377 = vld [vmem:[%s272 + $0xd0] sm:$0xf]
        %v378 = vld [vmem:[%s272 + $0xd4] sm:$0xf]
        %v379 = vld [vmem:[%s272 + $0xd8] sm:$0xf]
        %v380 = vld [vmem:[%s272 + $0xdc] sm:$0xf]
        %v381 = vld [vmem:[%s272 + $0xe0] sm:$0xf]
        %v382 = vld [vmem:[%s272 + $0xe4] sm:$0xf]
        %v383 = vld [vmem:[%s272 + $0xe8] sm:$0xf]
        %v384 = vld [vmem:[%s272 + $0xec] sm:$0xf]
        %v385 = vld [vmem:[%s272 + $0xf0] sm:$0xf]
        %v386 = vld [vmem:[%s272 + $0xf4] sm:$0xf]
        %v387 = vld [vmem:[%s272 + $0xf8] sm:$0xf]
        %v388 = vld [vmem:[%s272 + $0xfc] sm:$0xf]
        %v393 = vunpack.c.l.b16 %v321
        %v394 = vunpack.c.h.b16 %v321
        %v395 = vunpack.c.l.b16 %v322
        %v396 = vunpack.c.h.b16 %v322
        %v397 = vunpack.c.l.b16 %v323
        %v398 = vunpack.c.h.b16 %v323
        %v399 = vunpack.c.l.b16 %v324
        %v400 = vunpack.c.h.b16 %v324
        %v401 = vpack.c.b16 %v397, %v393
        %v402 = vpack.c.b16 %v398, %v394
        %v403 = vpack.c.b16 %v399, %v395
        %v404 = vpack.c.b16 %v400, %v396
        %v473 = vunpack.c.l.b16 %v325
        %v474 = vunpack.c.l.b16 %v326
        %v475 = vunpack.c.l.b16 %v327
        %v476 = vunpack.c.l.b16 %v328
        %v477 = vunpack.c.l.b16 %v329
        %v478 = vunpack.c.l.b16 %v330
        %v479 = vunpack.c.l.b16 %v331
        %v480 = vunpack.c.l.b16 %v332
        %v481 = vunpack.c.l.b16 %v333
        %v482 = vunpack.c.l.b16 %v334
        %v483 = vunpack.c.l.b16 %v335
        %v484 = vunpack.c.l.b16 %v336
        %v485 = vunpack.c.l.b16 %v337
        %v486 = vunpack.c.l.b16 %v338
        %v487 = vunpack.c.l.b16 %v339
        %v488 = vunpack.c.l.b16 %v340
        %v489 = vunpack.c.l.b16 %v341
        %v490 = vunpack.c.l.b16 %v342
        %v491 = vunpack.c.l.b16 %v343
        %v492 = vunpack.c.l.b16 %v344
        %v493 = vunpack.c.l.b16 %v345
        %v494 = vunpack.c.l.b16 %v346
        %v495 = vunpack.c.l.b16 %v347
        %v496 = vunpack.c.l.b16 %v348
        %v497 = vunpack.c.l.b16 %v349
        %v498 = vunpack.c.l.b16 %v350
        %v499 = vunpack.c.l.b16 %v351
        %v500 = vunpack.c.l.b16 %v352
        %v501 = vunpack.c.l.b16 %v353
        %v502 = vunpack.c.l.b16 %v354
        %v503 = vunpack.c.l.b16 %v355
        %v504 = vunpack.c.l.b16 %v356
        %v505 = vunpack.c.l.b16 %v357
        %v506 = vunpack.c.l.b16 %v358
        %v507 = vunpack.c.l.b16 %v359
        %v508 = vunpack.c.l.b16 %v360
        %v509 = vunpack.c.l.b16 %v361
        %v510 = vunpack.c.l.b16 %v362
        %v511 = vunpack.c.l.b16 %v363
        %v512 = vunpack.c.l.b16 %v364
        %v513 = vunpack.c.l.b16 %v365
        %v514 = vunpack.c.l.b16 %v366
        %v515 = vunpack.c.l.b16 %v367
        %v516 = vunpack.c.l.b16 %v368
        %v517 = vunpack.c.l.b16 %v369
        %v518 = vunpack.c.l.b16 %v370
        %v519 = vunpack.c.l.b16 %v371
        %v520 = vunpack.c.l.b16 %v372
        %v521 = vunpack.c.l.b16 %v373
        %v522 = vunpack.c.l.b16 %v374
        %v523 = vunpack.c.l.b16 %v375
        %v524 = vunpack.c.l.b16 %v376
        %v525 = vunpack.c.l.b16 %v377
        %v526 = vunpack.c.l.b16 %v378
        %v527 = vunpack.c.l.b16 %v379
        %v528 = vunpack.c.l.b16 %v380
        %v529 = vunpack.c.l.b16 %v381
        %v530 = vunpack.c.l.b16 %v382
        %v531 = vunpack.c.l.b16 %v383
        %v532 = vunpack.c.l.b16 %v384
        %v533 = vunpack.c.l.b16 %v385
        %v534 = vunpack.c.l.b16 %v386
        %v535 = vunpack.c.l.b16 %v387
        %v536 = vunpack.c.l.b16 %v388
        %v537 = vpack.c.b16 %v474, %v473
        %v538 = vpack.c.b16 %v476, %v475
        %v539 = vpack.c.b16 %v478, %v477
        %v540 = vpack.c.b16 %v480, %v479
        %v541 = vpack.c.b16 %v482, %v481
        %v542 = vpack.c.b16 %v484, %v483
        %v543 = vpack.c.b16 %v486, %v485
        %v544 = vpack.c.b16 %v488, %v487
        %v545 = vpack.c.b16 %v490, %v489
        %v546 = vpack.c.b16 %v492, %v491
        %v547 = vpack.c.b16 %v494, %v493
        %v548 = vpack.c.b16 %v496, %v495
        %v549 = vpack.c.b16 %v498, %v497
        %v550 = vpack.c.b16 %v500, %v499
        %v551 = vpack.c.b16 %v502, %v501
        %v552 = vpack.c.b16 %v504, %v503
        %v553 = vpack.c.b16 %v506, %v505
        %v554 = vpack.c.b16 %v508, %v507
        %v555 = vpack.c.b16 %v510, %v509
        %v556 = vpack.c.b16 %v512, %v511
        %v557 = vpack.c.b16 %v514, %v513
        %v558 = vpack.c.b16 %v516, %v515
        %v559 = vpack.c.b16 %v518, %v517
        %v560 = vpack.c.b16 %v520, %v519
        %v561 = vpack.c.b16 %v522, %v521
        %v562 = vpack.c.b16 %v524, %v523
        %v563 = vpack.c.b16 %v526, %v525
        %v564 = vpack.c.b16 %v528, %v527
        %v565 = vpack.c.b16 %v530, %v529
        %v566 = vpack.c.b16 %v532, %v531
        %v567 = vpack.c.b16 %v534, %v533
        %v568 = vpack.c.b16 %v536, %v535
        %601 = vmatprep.subr.bf16.mxu0 0
        %602 = vmatpush1.bf16.msra.mxu0 %v537
        %603 = vmatprep.subr.bf16.mxu0 0
        %604 = vmatpush1.bf16.msra.mxu0 %v538
        %605 = vmatprep.subr.bf16.mxu0 0
        %606 = vmatpush1.bf16.msra.mxu0 %v539
        %607 = vmatprep.subr.bf16.mxu0 0
        %608 = vmatpush1.bf16.msra.mxu0 %v540
        %609 = vmatprep.subr.bf16.mxu0 0
        %610 = vmatpush1.bf16.msra.mxu0 %v541
        %611 = vmatprep.subr.bf16.mxu0 0
        %612 = vmatpush1.bf16.msra.mxu0 %v542
        %613 = vmatprep.subr.bf16.mxu0 0
        %614 = vmatpush1.bf16.msra.mxu0 %v543
        %615 = vmatprep.subr.bf16.mxu0 0
        %616 = vmatpush1.bf16.msra.mxu0 %v544
        %617 = vmatprep.subr.bf16.mxu0 0
        %618 = vmatpush1.bf16.msra.mxu0 %v545
        %619 = vmatprep.subr.bf16.mxu0 0
        %620 = vmatpush1.bf16.msra.mxu0 %v546
        %621 = vmatprep.subr.bf16.mxu0 0
        %622 = vmatpush1.bf16.msra.mxu0 %v547
        %623 = vmatprep.subr.bf16.mxu0 0
        %624 = vmatpush1.bf16.msra.mxu0 %v548
        %625 = vmatprep.subr.bf16.mxu0 0
        %626 = vmatpush1.bf16.msra.mxu0 %v549
        %627 = vmatprep.subr.bf16.mxu0 0
        %628 = vmatpush1.bf16.msra.mxu0 %v550
        %629 = vmatprep.subr.bf16.mxu0 0
        %630 = vmatpush1.bf16.msra.mxu0 %v551
        %631 = vmatprep.subr.bf16.mxu0 0
        %632 = vmatpush1.bf16.msra.mxu0 %v552
        %633 = vmatprep.mubr.bf16.mxu0 %v402
        %634 = vmatmul.mubr.bf16.gmra.mrb[0].mxu0 %v401
        %v635 = vpop.f32.mrb[0].mxu0
        %v636 = vadd.f32 0.0, %v635
        %v637 = vpop.f32.mrb[0].mxu0
        %v638 = vpop.f32.mrb[0].mxu0
        %v639 = vadd.f32 0.0, %v638
        %v640 = vpop.f32.mrb[0].mxu0
        %641 = vdwg.mxu0
        %642 = vmatprep.subr.bf16.mxu0 0
        %643 = vmatpush1.bf16.msra.mxu0 %v553
        %644 = vmatprep.subr.bf16.mxu0 0
        %645 = vmatpush1.bf16.msra.mxu0 %v554
        %646 = vmatprep.subr.bf16.mxu0 0
        %647 = vmatpush1.bf16.msra.mxu0 %v555
        %648 = vmatprep.subr.bf16.mxu0 0
        %649 = vmatpush1.bf16.msra.mxu0 %v556
        %650 = vmatprep.subr.bf16.mxu0 0
        %651 = vmatpush1.bf16.msra.mxu0 %v557
        %652 = vmatprep.subr.bf16.mxu0 0
        %653 = vmatpush1.bf16.msra.mxu0 %v558
        %654 = vmatprep.subr.bf16.mxu0 0
        %655 = vmatpush1.bf16.msra.mxu0 %v559
        %656 = vmatprep.subr.bf16.mxu0 0
        %657 = vmatpush1.bf16.msra.mxu0 %v560
        %658 = vmatprep.subr.bf16.mxu0 0
        %659 = vmatpush1.bf16.msra.mxu0 %v561
        %660 = vmatprep.subr.bf16.mxu0 0
        %661 = vmatpush1.bf16.msra.mxu0 %v562
        %662 = vmatprep.subr.bf16.mxu0 0
        %663 = vmatpush1.bf16.msra.mxu0 %v563
        %664 = vmatprep.subr.bf16.mxu0 0
        %665 = vmatpush1.bf16.msra.mxu0 %v564
        %666 = vmatprep.subr.bf16.mxu0 0
        %667 = vmatpush1.bf16.msra.mxu0 %v565
        %668 = vmatprep.subr.bf16.mxu0 0
        %669 = vmatpush1.bf16.msra.mxu0 %v566
        %670 = vmatprep.subr.bf16.mxu0 0
        %671 = vmatpush1.bf16.msra.mxu0 %v567
        %672 = vmatprep.subr.bf16.mxu0 0
        %673 = vmatpush1.bf16.msra.mxu0 %v568
        %674 = vmatprep.mubr.bf16.mxu0 %v404
        %675 = vmatmul.mubr.bf16.gmra.mrb[0].mxu0 %v403
        %v676 = vpop.f32.mrb[0].mxu0
        %v677 = vadd.f32 %v636, %v676
        %v678 = vpop.f32.mrb[0].mxu0
        %v679 = vpop.f32.mrb[0].mxu0
        %v680 = vadd.f32 %v639, %v679
        %v681 = vpop.f32.mrb[0].mxu0
        %682 = vdwg.mxu0
        %v683 = vadd.f32 %v319, %v677
        %v684 = vadd.f32 %v320, %v680
        %685 = vst [vmem:[#allocation2] sm:$0xff] %v683
        %686 = vst [vmem:[#allocation2 + $0x8] sm:$0xff] %v684
        %p687 = scmp.eq.s32.totalorder %s24, 1
        // Predicated region
        $region72: #{fcc_network_forward.1} parent=58 // pred_check
          %p688 = pneg %p687
        $region73: #{fcc_network_forward.1} parent=58 // pred_check_branch
          %690 = sbr.rel (%p688) target = $region75
        $region74: #{fcc_network_forward.1} parent=58 // pred_region
          %v691 = vld [vmem:[#allocation2] sm:$0xff]
          %v692 = vld [vmem:[#allocation2 + $0x8] sm:$0xff]
          %v693 = vmax.f32 %v691, 0.0
          %v694 = vmax.f32 %v692, 0.0
          %v695 = vpack.c.bf16 %v694, %v693
          %v696 = vld [vmem:[%s2] sm:$0xf]
          %v697 = vld [vmem:[%s2 + $0x4] sm:$0xf]
          %v698 = vld [vmem:[%s2 + $0x8] sm:$0xf]
          %v699 = vld [vmem:[%s2 + $0xc] sm:$0xf]
          %v700 = vld [vmem:[%s2 + $0x10] sm:$0xf]
          %v701 = vld [vmem:[%s2 + $0x14] sm:$0xf]
          %v702 = vld [vmem:[%s2 + $0x18] sm:$0xf]
          %v703 = vld [vmem:[%s2 + $0x1c] sm:$0xf]
          %v704 = vld [vmem:[%s2 + $0x20] sm:$0xf]
          %v705 = vld [vmem:[%s2 + $0x24] sm:$0xf]
          %v706 = vld [vmem:[%s2 + $0x28] sm:$0xf]
          %v707 = vld [vmem:[%s2 + $0x2c] sm:$0xf]
          %v708 = vld [vmem:[%s2 + $0x30] sm:$0xf]
          %v709 = vld [vmem:[%s2 + $0x34] sm:$0xf]
          %v710 = vld [vmem:[%s2 + $0x38] sm:$0xf]
          %v711 = vld [vmem:[%s2 + $0x3c] sm:$0xf]
          %v728 = vunpack.c.l.b16 %v696
          %v729 = vunpack.c.l.b16 %v697
          %v730 = vunpack.c.l.b16 %v698
          %v731 = vunpack.c.l.b16 %v699
          %v732 = vunpack.c.l.b16 %v700
          %v733 = vunpack.c.l.b16 %v701
          %v734 = vunpack.c.l.b16 %v702
          %v735 = vunpack.c.l.b16 %v703
          %v736 = vunpack.c.l.b16 %v704
          %v737 = vunpack.c.l.b16 %v705
          %v738 = vunpack.c.l.b16 %v706
          %v739 = vunpack.c.l.b16 %v707
          %v740 = vunpack.c.l.b16 %v708
          %v741 = vunpack.c.l.b16 %v709
          %v742 = vunpack.c.l.b16 %v710
          %v743 = vunpack.c.l.b16 %v711
          %v744 = vpack.c.b16 %v729, %v728
          %v745 = vpack.c.b16 %v731, %v730
          %v746 = vpack.c.b16 %v733, %v732
          %v747 = vpack.c.b16 %v735, %v734
          %v748 = vpack.c.b16 %v737, %v736
          %v749 = vpack.c.b16 %v739, %v738
          %v750 = vpack.c.b16 %v741, %v740
          %v751 = vpack.c.b16 %v743, %v742
          %760 = vmatprep.subr.bf16.mxu0 0
          %761 = vmatpush1.bf16.msra.mxu0 %v744
          %762 = vmatprep.subr.bf16.mxu0 0
          %763 = vmatpush1.bf16.msra.mxu0 %v745
          %764 = vmatprep.subr.bf16.mxu0 0
          %765 = vmatpush1.bf16.msra.mxu0 %v746
          %766 = vmatprep.subr.bf16.mxu0 0
          %767 = vmatpush1.bf16.msra.mxu0 %v747
          %768 = vmatprep.subr.bf16.mxu0 0
          %769 = vmatpush1.bf16.msra.mxu0 %v748
          %770 = vmatprep.subr.bf16.mxu0 0
          %771 = vmatpush1.bf16.msra.mxu0 %v749
          %772 = vmatprep.subr.bf16.mxu0 0
          %773 = vmatpush1.bf16.msra.mxu0 %v750
          %774 = vmatprep.subr.bf16.mxu0 0
          %775 = vmatpush1.bf16.msra.mxu0 %v751
          %776 = vmatprep.subr.bf16.mxu0 0
          %777 = vmatpush1.bf16.msra.mxu0 0
          %778 = vmatprep.subr.bf16.mxu0 0
          %779 = vmatpush1.bf16.msra.mxu0 0
          %780 = vmatprep.subr.bf16.mxu0 0
          %781 = vmatpush1.bf16.msra.mxu0 0
          %782 = vmatprep.subr.bf16.mxu0 0
          %783 = vmatpush1.bf16.msra.mxu0 0
          %784 = vmatprep.subr.bf16.mxu0 0
          %785 = vmatpush1.bf16.msra.mxu0 0
          %786 = vmatprep.subr.bf16.mxu0 0
          %787 = vmatpush1.bf16.msra.mxu0 0
          %788 = vmatprep.subr.bf16.mxu0 0
          %789 = vmatpush1.bf16.msra.mxu0 0
          %790 = vmatprep.subr.bf16.mxu0 0
          %791 = vmatpush1.bf16.msra.mxu0 0
          %792 = vmatprep.mubr.bf16.mxu0 0
          %793 = vmatmul.mubr.bf16.gmra.mrb[0].mxu0 %v695
          %v794 = vpop.f32.mrb[0].mxu0
          %v795 = vadd.f32 0.0, %v794
          %v796 = vpop.f32.mrb[0].mxu0
          %v797 = vpop.f32.mrb[0].mxu0
          %v798 = vadd.f32 0.0, %v797
          %v799 = vpop.f32.mrb[0].mxu0
          %800 = vdwg.mxu0
          %v801 = vmax.f32 %v795, 0.0
          %v802 = vmax.f32 %v798, 0.0
          %v803 = vpack.c.bf16 %v802, %v801
          %v804 = vld [vmem:[%s3] sm:$0xf]
          %v805 = vld [vmem:[%s3 + $0x4] sm:$0xf]
          %v806 = vld [vmem:[%s3 + $0x8] sm:$0xf]
          %v807 = vld [vmem:[%s3 + $0xc] sm:$0xf]
          %v808 = vld [vmem:[%s3 + $0x10] sm:$0xf]
          %v809 = vld [vmem:[%s3 + $0x14] sm:$0xf]
          %v810 = vld [vmem:[%s3 + $0x18] sm:$0xf]
          %v811 = vld [vmem:[%s3 + $0x1c] sm:$0xf]
          %v812 = vld [vmem:[%s3 + $0x20] sm:$0xf]
          %v813 = vld [vmem:[%s3 + $0x24] sm:$0xf]
          %v814 = vld [vmem:[%s3 + $0x28] sm:$0xf]
          %v815 = vld [vmem:[%s3 + $0x2c] sm:$0xf]
          %v816 = vld [vmem:[%s3 + $0x30] sm:$0xf]
          %v817 = vld [vmem:[%s3 + $0x34] sm:$0xf]
          %v818 = vld [vmem:[%s3 + $0x38] sm:$0xf]
          %v819 = vld [vmem:[%s3 + $0x3c] sm:$0xf]
          %v836 = vunpack.c.l.b16 %v804
          %v837 = vunpack.c.l.b16 %v805
          %v838 = vunpack.c.l.b16 %v806
          %v839 = vunpack.c.l.b16 %v807
          %v840 = vunpack.c.l.b16 %v808
          %v841 = vunpack.c.l.b16 %v809
          %v842 = vunpack.c.l.b16 %v810
          %v843 = vunpack.c.l.b16 %v811
          %v844 = vunpack.c.l.b16 %v812
          %v845 = vunpack.c.l.b16 %v813
          %v846 = vunpack.c.l.b16 %v814
          %v847 = vunpack.c.l.b16 %v815
          %v848 = vunpack.c.l.b16 %v816
          %v849 = vunpack.c.l.b16 %v817
          %v850 = vunpack.c.l.b16 %v818
          %v851 = vunpack.c.l.b16 %v819
          %v852 = vpack.c.b16 %v837, %v836
          %v853 = vpack.c.b16 %v839, %v838
          %v854 = vpack.c.b16 %v841, %v840
          %v855 = vpack.c.b16 %v843, %v842
          %v856 = vpack.c.b16 %v845, %v844
          %v857 = vpack.c.b16 %v847, %v846
          %v858 = vpack.c.b16 %v849, %v848
          %v859 = vpack.c.b16 %v851, %v850
          %868 = vmatprep.subr.bf16.mxu0 0
          %869 = vmatpush1.bf16.msra.mxu0 %v852
          %870 = vmatprep.subr.bf16.mxu0 0
          %871 = vmatpush1.bf16.msra.mxu0 %v853
          %872 = vmatprep.subr.bf16.mxu0 0
          %873 = vmatpush1.bf16.msra.mxu0 %v854
          %874 = vmatprep.subr.bf16.mxu0 0
          %875 = vmatpush1.bf16.msra.mxu0 %v855
          %876 = vmatprep.subr.bf16.mxu0 0
          %877 = vmatpush1.bf16.msra.mxu0 %v856
          %878 = vmatprep.subr.bf16.mxu0 0
          %879 = vmatpush1.bf16.msra.mxu0 %v857
          %880 = vmatprep.subr.bf16.mxu0 0
          %881 = vmatpush1.bf16.msra.mxu0 %v858
          %882 = vmatprep.subr.bf16.mxu0 0
          %883 = vmatpush1.bf16.msra.mxu0 %v859
          %884 = vmatprep.subr.bf16.mxu0 0
          %885 = vmatpush1.bf16.msra.mxu0 0
          %886 = vmatprep.subr.bf16.mxu0 0
          %887 = vmatpush1.bf16.msra.mxu0 0
          %888 = vmatprep.subr.bf16.mxu0 0
          %889 = vmatpush1.bf16.msra.mxu0 0
          %890 = vmatprep.subr.bf16.mxu0 0
          %891 = vmatpush1.bf16.msra.mxu0 0
          %892 = vmatprep.subr.bf16.mxu0 0
          %893 = vmatpush1.bf16.msra.mxu0 0
          %894 = vmatprep.subr.bf16.mxu0 0
          %895 = vmatpush1.bf16.msra.mxu0 0
          %896 = vmatprep.subr.bf16.mxu0 0
          %897 = vmatpush1.bf16.msra.mxu0 0
          %898 = vmatprep.subr.bf16.mxu0 0
          %899 = vmatpush1.bf16.msra.mxu0 0
          %900 = vmatprep.mubr.bf16.mxu0 0
          %901 = vmatmul.mubr.bf16.gmra.mrb[0].mxu0 %v803
          %v902 = vpop.f32.mrb[0].mxu0
          %v903 = vadd.f32 0.0, %v902
          %v904 = vpop.f32.mrb[0].mxu0
          %v905 = vpop.f32.mrb[0].mxu0
          %v906 = vadd.f32 0.0, %v905
          %v907 = vpop.f32.mrb[0].mxu0
          %908 = vdwg.mxu0
          %v909 = vmax.f32 %v903, 0.0
          %v910 = vmax.f32 %v906, 0.0
          %v911 = vpack.c.bf16 %v910, %v909
          %v912 = vld [vmem:[%s4] sm:$0xf]
          %v913 = vld [vmem:[%s4 + $0x4] sm:$0xf]
          %v914 = vld [vmem:[%s4 + $0x8] sm:$0xf]
          %v915 = vld [vmem:[%s4 + $0xc] sm:$0xf]
          %v916 = vld [vmem:[%s4 + $0x10] sm:$0xf]
          %v917 = vld [vmem:[%s4 + $0x14] sm:$0xf]
          %v918 = vld [vmem:[%s4 + $0x18] sm:$0xf]
          %v919 = vld [vmem:[%s4 + $0x1c] sm:$0xf]
          %v920 = vld [vmem:[%s4 + $0x20] sm:$0xf]
          %v921 = vld [vmem:[%s4 + $0x24] sm:$0xf]
          %v922 = vld [vmem:[%s4 + $0x28] sm:$0xf]
          %v923 = vld [vmem:[%s4 + $0x2c] sm:$0xf]
          %v924 = vld [vmem:[%s4 + $0x30] sm:$0xf]
          %v925 = vld [vmem:[%s4 + $0x34] sm:$0xf]
          %v926 = vld [vmem:[%s4 + $0x38] sm:$0xf]
          %v927 = vld [vmem:[%s4 + $0x3c] sm:$0xf]
          %v944 = vunpack.c.l.b16 %v912
          %v945 = vunpack.c.l.b16 %v913
          %v946 = vunpack.c.l.b16 %v914
          %v947 = vunpack.c.l.b16 %v915
          %v948 = vunpack.c.l.b16 %v916
          %v949 = vunpack.c.l.b16 %v917
          %v950 = vunpack.c.l.b16 %v918
          %v951 = vunpack.c.l.b16 %v919
          %v952 = vunpack.c.l.b16 %v920
          %v953 = vunpack.c.l.b16 %v921
          %v954 = vunpack.c.l.b16 %v922
          %v955 = vunpack.c.l.b16 %v923
          %v956 = vunpack.c.l.b16 %v924
          %v957 = vunpack.c.l.b16 %v925
          %v958 = vunpack.c.l.b16 %v926
          %v959 = vunpack.c.l.b16 %v927
          %v960 = vpack.c.b16 %v945, %v944
          %v961 = vpack.c.b16 %v947, %v946
          %v962 = vpack.c.b16 %v949, %v948
          %v963 = vpack.c.b16 %v951, %v950
          %v964 = vpack.c.b16 %v953, %v952
          %v965 = vpack.c.b16 %v955, %v954
          %v966 = vpack.c.b16 %v957, %v956
          %v967 = vpack.c.b16 %v959, %v958
          %976 = vmatprep.subr.bf16.mxu0 0
          %977 = vmatpush1.bf16.msra.mxu0 %v960
          %978 = vmatprep.subr.bf16.mxu0 0
          %979 = vmatpush1.bf16.msra.mxu0 %v961
          %980 = vmatprep.subr.bf16.mxu0 0
          %981 = vmatpush1.bf16.msra.mxu0 %v962
          %982 = vmatprep.subr.bf16.mxu0 0
          %983 = vmatpush1.bf16.msra.mxu0 %v963
          %984 = vmatprep.subr.bf16.mxu0 0
          %985 = vmatpush1.bf16.msra.mxu0 %v964
          %986 = vmatprep.subr.bf16.mxu0 0
          %987 = vmatpush1.bf16.msra.mxu0 %v965
          %988 = vmatprep.subr.bf16.mxu0 0
          %989 = vmatpush1.bf16.msra.mxu0 %v966
          %990 = vmatprep.subr.bf16.mxu0 0
          %991 = vmatpush1.bf16.msra.mxu0 %v967
          %992 = vmatprep.subr.bf16.mxu0 0
          %993 = vmatpush1.bf16.msra.mxu0 0
          %994 = vmatprep.subr.bf16.mxu0 0
          %995 = vmatpush1.bf16.msra.mxu0 0
          %996 = vmatprep.subr.bf16.mxu0 0
          %997 = vmatpush1.bf16.msra.mxu0 0
          %998 = vmatprep.subr.bf16.mxu0 0
          %999 = vmatpush1.bf16.msra.mxu0 0
          %1000 = vmatprep.subr.bf16.mxu0 0
          %1001 = vmatpush1.bf16.msra.mxu0 0
          %1002 = vmatprep.subr.bf16.mxu0 0
          %1003 = vmatpush1.bf16.msra.mxu0 0
          %1004 = vmatprep.subr.bf16.mxu0 0
          %1005 = vmatpush1.bf16.msra.mxu0 0
          %1006 = vmatprep.subr.bf16.mxu0 0
          %1007 = vmatpush1.bf16.msra.mxu0 0
          %1008 = vmatprep.mubr.bf16.mxu0 0
          %1009 = vmatmul.mubr.bf16.gmra.mrb[0].mxu0 %v911
          %v1010 = vpop.f32.mrb[0].mxu0
          %v1011 = vadd.f32 0.0, %v1010
          %v1012 = vpop.f32.mrb[0].mxu0
          %v1013 = vpop.f32.mrb[0].mxu0
          %v1014 = vadd.f32 0.0, %v1013
          %v1015 = vpop.f32.mrb[0].mxu0
          %1016 = vdwg.mxu0
          %1017 = vst [vmem:[%s310] sm:$0xff] %v1011
          %1018 = vst [vmem:[%s310 + $0x8] sm:$0xff] %v1014
        $region75: #{fcc_network_forward.1} parent=58 // pred_fallthru
          _
        %s1019 = smul.u32 2, %s23
        %p1020 = scmp.lt.s32.totalorder %s1019, 1
        %s1021 = scalar_select %p1020, %s1019, 1
        %s1022 = smul.addr %s1021, 8
        %s1023 = scalar_lea.vmem %s5, %s1022
        // Predicated region
        $region76: #{fcc_network_forward.1} parent=58 // pred_check
          %p1024 = pneg %p166
        $region77: #{fcc_network_forward.1} parent=58 // pred_check_branch
          %1026 = sbr.rel (%p1024) target = $region79
        $region78: #{fcc_network_forward.1} parent=58 // pred_region
          %s1027 = smul.u32 2, %s23
        $region79: #{fcc_network_forward.1} parent=58 // pred_fallthru
          _
        // Predicated region
        $region80: #{fcc_network_forward.1} parent=58 // pred_check
          %p1028 = pneg %p166
        $region81: #{fcc_network_forward.1} parent=58 // pred_check_branch
          %1030 = sbr.rel (%p1028) target = $region83
        $region82: #{fcc_network_forward.1} parent=58 // pred_region
          %s1031 = smul.u32 2, %s23
          %p1032 = scmp.lt.s32.totalorder %s1031, 1
          %s1033 = scalar_select %p1032, %s1031, 1
          %s1034 = smul.addr %s1033, 8
          %s1035 = scalar_lea.vmem %s5, %s1034
        $region83: #{fcc_network_forward.1} parent=58 // pred_fallthru
          _
      $region59: #{fcc_network_forward.1} parent=5 // pred_fallthru
        _
      %p1036 = scmp.le.s32.totalorder 2, %s14
      // Predicated region
      $region84: #{fcc_network_forward.1} parent=5 // pred_check
        %p1037 = pneg %p1036
      $region85: #{fcc_network_forward.1} parent=5 // pred_check_branch
        %1039 = sbr.rel (%p1037) target = $region87
      $region86: #{fcc_network_forward.1} parent=5 // pred_region
        %s1040 = ssub.s32 %s14, 2
      $region87: #{fcc_network_forward.1} parent=5 // pred_fallthru
        _
    $region6: #{fcc_network_forward.1} parent=1 // loop_footer
      %s18 = sadd.s32 1, %s14
    $region7: #{fcc_network_forward.1} parent=1 // loop_footer_branch
      %13 = sbr.rel target = $region3
    $region8: #{fcc_network_forward.1} parent=1 // loop_exit
      _
    %1041 = vsyncpa [#allocation5], 1
    %s1042 = scalar_lea.sflag [#allocation5], 1
    %1043 = vsyncpa %s1042, 1

</llo_original>
